<compile_context>
chip_gen: v7x
topology: tpu7x:2x2x1
jax: 0.10.0
libtpu: 0.0.40
codegen_flags: <defaults>
</compile_context>

<pallas_src>
import math

import jax
import jax.numpy as jnp
from jax import lax
from jax.experimental import pallas as pl
from jax.experimental.pallas import tpu as pltpu

# dropout_p is undefined in the reference snippet; we use 0.0 (identity /
# inference behavior) so results are deterministic.
# TODO(synk): if a nonzero dropout_p is required, add pltpu.prng_seed +
# pltpu.prng_random_bits Bernoulli masking (the 1/(1-p) rescale alone is wrong).
DROPOUT_P = 0.0


def _attn_kernel(q_ref, x1_ref, x2_ref, o_ref, *, scale, batch):
    # q_ref : (Bq, D)      full q matrix (broadcast over x1's batch)
    # x1_ref: (B, L, D)    whole x1 in VMEM
    # x2_ref: (B, L, Dv)   whole x2 in VMEM
    # o_ref : (B, Bq, Dv)  whole output in VMEM
    q = q_ref[...]                                           # (Bq, D) f32

    # Static unroll over the (tiny) batch dim: single invocation, no grid steps.
    for b in range(batch):
        k = x1_ref[b]                                        # (L, D)
        v = x2_ref[b]                                        # (L, Dv)

        # qk = q @ x1^T via dot_general (contract last dims, no transposed copy),
        # scaled by sqrt(embed_dim) per the reference module.
        s = lax.dot_general(
            q, k,
            dimension_numbers=(((1,), (1,)), ((), ())),
            preferred_element_type=jnp.float32,
        ) * scale                                            # (Bq, L)

        # softmax over the last dim (max-subtracted, f32 accumulation)
        m = jnp.max(s, axis=-1, keepdims=True)
        p = jnp.exp(s - m)
        p = p * pl.reciprocal(jnp.sum(p, axis=-1, keepdims=True), approx=True)

        # dropout (p = 0.0 -> identity)
        if DROPOUT_P > 0.0:
            p = p * (1.0 / (1.0 - DROPOUT_P))  # see TODO above: mask omitted

        out = jnp.dot(p, v, preferred_element_type=jnp.float32)   # (Bq, Dv)
        o_ref[b] = out.astype(o_ref.dtype)


def model_forward(q, x1, x2, embed_dim):
    Bq, D = q.shape
    B, L, D1 = x1.shape
    B2, L2, Dv = x2.shape
    assert D == D1 and L == L2 and B == B2
    scale = float(math.sqrt(embed_dim))

    kernel = lambda qr, x1r, x2r, outr: _attn_kernel(
        qr, x1r, x2r, outr, scale=scale, batch=B)

    vmem = pltpu.MemorySpace.VMEM
    # Single invocation: no grid, whole (few-KB) arrays resident in VMEM, one
    # DMA set in / one out. Removes all per-grid-step overhead.
    return pl.pallas_call(
        kernel,
        out_shape=jax.ShapeDtypeStruct((B, Bq, Dv), jnp.float32),
        in_specs=[
            pl.BlockSpec(memory_space=vmem),   # q
            pl.BlockSpec(memory_space=vmem),   # x1
            pl.BlockSpec(memory_space=vmem),   # x2
        ],
        out_specs=pl.BlockSpec(memory_space=vmem),
    )(q, x1, x2)


def reference_forward(q, x1, x2, embed_dim):
    # Pure-JAX reference mirroring torch.matmul broadcasting semantics.
    scale = math.sqrt(embed_dim)
    qk = jnp.einsum("qd,bld->bql", q, x1) * scale
    sm = jax.nn.softmax(qk, axis=-1)
    return jnp.einsum("bql,blv->bqv", sm, x2)


if __name__ == "__main__":
    key = jax.random.PRNGKey(0)
    k1, k2, k3 = jax.random.split(key, 3)

    # Shapes from the PyTorch snippet: q (2,16), x1 (2,16,16), x2 (2,16,4)
    embed_dim = 16
    q = jax.random.normal(k1, (2, 16), dtype=jnp.float32)
    x1 = jax.random.normal(k2, (2, 16, 16), dtype=jnp.float32)
    x2 = jax.random.normal(k3, (2, 16, 4), dtype=jnp.float32)

    out = model_forward(q, x1, x2, embed_dim)
    out = jax.block_until_ready(out)

    ref = reference_forward(q, x1, x2, embed_dim)
    assert out.shape == (2, 2, 4), out.shape
    # approx reciprocal in the softmax denominator -> ~2^-12 relative error,
    # so compare with a slightly relaxed (still tight) tolerance.
    assert jnp.allclose(out, ref, atol=1e-2, rtol=1e-2), "mismatch vs reference"

    print("KERNEL_OK")
</pallas_src>

<mosaic_0001>
module attributes {stable_mosaic.version = 11 : i64} {
  func.func @_lambda_(%arg0: memref<2x16xf32, #tpu.memory_space<vmem>>, %arg1: memref<2x16x16xf32, #tpu.memory_space<vmem>>, %arg2: memref<2x16x4xf32, #tpu.memory_space<vmem>>, %arg3: memref<2x2x4xf32, #tpu.memory_space<vmem>>) attributes {dimension_semantics = [], scalar_prefetch = 0 : i64, scratch_operands = 0 : i64, tpu.core_type = #tpu.core_type<tc>} {
    %c0 = arith.constant 0 : index
    %c0_0 = arith.constant 0 : index
    %0 = vector.load %arg0[%c0, %c0_0] : memref<2x16xf32, #tpu.memory_space<vmem>>, vector<2x16xf32>
    %c0_1 = arith.constant 0 : index
    %c0_2 = arith.constant 0 : index
    %c0_3 = arith.constant 0 : index
    %1 = vector.load %arg1[%c0_1, %c0_2, %c0_3] : memref<2x16x16xf32, #tpu.memory_space<vmem>>, vector<1x16x16xf32>
    %2 = vector.shape_cast %1 : vector<1x16x16xf32> to vector<16x16xf32>
    %c0_4 = arith.constant 0 : index
    %c0_5 = arith.constant 0 : index
    %c0_6 = arith.constant 0 : index
    %3 = vector.load %arg2[%c0_4, %c0_5, %c0_6] : memref<2x16x4xf32, #tpu.memory_space<vmem>>, vector<1x16x4xf32>
    %4 = vector.shape_cast %3 : vector<1x16x4xf32> to vector<16x4xf32>
    %cst = arith.constant dense<0.000000e+00> : vector<2x16xf32>
    %5 = tpu.matmul %0, %2, %cst {dimension_numbers = #tpu.dot_dimension_numbers<[1], [1], [0], [0], [0, 0, 1, 0], [], []>} : vector<2x16xf32>, vector<16x16xf32>, vector<2x16xf32> -> vector<2x16xf32>
    %cst_7 = arith.constant 4.000000e+00 : f32
    %6 = vector.broadcast %cst_7 : f32 to vector<2x16xf32>
    %7 = arith.mulf %5, %6 : vector<2x16xf32>
    %cst_8 = arith.constant dense<0xFF800000> : vector<2xf32>
    %8 = vector.multi_reduction <maximumf>, %7, %cst_8 [1] : vector<2x16xf32> to vector<2xf32>
    %9 = vector.shape_cast %8 : vector<2xf32> to vector<2x1xf32>
    %10 = vector.broadcast %9 : vector<2x1xf32> to vector<2x16xf32>
    %11 = arith.subf %7, %10 : vector<2x16xf32>
    %12 = math.exp %11 : vector<2x16xf32>
    %cst_9 = arith.constant dense<0.000000e+00> : vector<2xf32>
    %13 = vector.multi_reduction <add>, %12, %cst_9 [1] : vector<2x16xf32> to vector<2xf32>
    %14 = vector.shape_cast %13 : vector<2xf32> to vector<2x1xf32>
    %15 = tpu.reciprocal %14 {approx = true} : vector<2x1xf32> -> vector<2x1xf32>
    %16 = vector.broadcast %15 : vector<2x1xf32> to vector<2x16xf32>
    %17 = arith.mulf %12, %16 : vector<2x16xf32>
    %cst_10 = arith.constant dense<0.000000e+00> : vector<2x4xf32>
    %18 = tpu.matmul %17, %4, %cst_10 {dimension_numbers = #tpu.dot_dimension_numbers<[1], [0], [0], [1], [0, 0, 1, 1], [], []>} : vector<2x16xf32>, vector<16x4xf32>, vector<2x4xf32> -> vector<2x4xf32>
    %c0_11 = arith.constant 0 : index
    %c0_12 = arith.constant 0 : index
    %c0_13 = arith.constant 0 : index
    %19 = vector.load %arg3[%c0_11, %c0_12, %c0_13] : memref<2x2x4xf32, #tpu.memory_space<vmem>>, vector<1x2x4xf32>
    %20 = vector.shape_cast %19 : vector<1x2x4xf32> to vector<2x4xf32>
    %21 = vector.shape_cast %18 : vector<2x4xf32> to vector<1x2x4xf32>
    tpu.vector_store %arg3[%c0_11, %c0_12, %c0_13], %21 {strides = array<i32>} : memref<2x2x4xf32, #tpu.memory_space<vmem>>, vector<1x2x4xf32>,
    %c1 = arith.constant 1 : index
    %c0_14 = arith.constant 0 : index
    %c0_15 = arith.constant 0 : index
    %22 = vector.load %arg1[%c1, %c0_14, %c0_15] : memref<2x16x16xf32, #tpu.memory_space<vmem>>, vector<1x16x16xf32>
    %23 = vector.shape_cast %22 : vector<1x16x16xf32> to vector<16x16xf32>
    %c1_16 = arith.constant 1 : index
    %c0_17 = arith.constant 0 : index
    %c0_18 = arith.constant 0 : index
    %24 = vector.load %arg2[%c1_16, %c0_17, %c0_18] : memref<2x16x4xf32, #tpu.memory_space<vmem>>, vector<1x16x4xf32>
    %25 = vector.shape_cast %24 : vector<1x16x4xf32> to vector<16x4xf32>
    %cst_19 = arith.constant dense<0.000000e+00> : vector<2x16xf32>
    %26 = tpu.matmul %0, %23, %cst_19 {dimension_numbers = #tpu.dot_dimension_numbers<[1], [1], [0], [0], [0, 0, 1, 0], [], []>} : vector<2x16xf32>, vector<16x16xf32>, vector<2x16xf32> -> vector<2x16xf32>
    %cst_20 = arith.constant 4.000000e+00 : f32
    %27 = vector.broadcast %cst_20 : f32 to vector<2x16xf32>
    %28 = arith.mulf %26, %27 : vector<2x16xf32>
    %cst_21 = arith.constant dense<0xFF800000> : vector<2xf32>
    %29 = vector.multi_reduction <maximumf>, %28, %cst_21 [1] : vector<2x16xf32> to vector<2xf32>
    %30 = vector.shape_cast %29 : vector<2xf32> to vector<2x1xf32>
    %31 = vector.broadcast %30 : vector<2x1xf32> to vector<2x16xf32>
    %32 = arith.subf %28, %31 : vector<2x16xf32>
    %33 = math.exp %32 : vector<2x16xf32>
    %cst_22 = arith.constant dense<0.000000e+00> : vector<2xf32>
    %34 = vector.multi_reduction <add>, %33, %cst_22 [1] : vector<2x16xf32> to vector<2xf32>
    %35 = vector.shape_cast %34 : vector<2xf32> to vector<2x1xf32>
    %36 = tpu.reciprocal %35 {approx = true} : vector<2x1xf32> -> vector<2x1xf32>
    %37 = vector.broadcast %36 : vector<2x1xf32> to vector<2x16xf32>
    %38 = arith.mulf %33, %37 : vector<2x16xf32>
    %cst_23 = arith.constant dense<0.000000e+00> : vector<2x4xf32>
    %39 = tpu.matmul %38, %25, %cst_23 {dimension_numbers = #tpu.dot_dimension_numbers<[1], [0], [0], [1], [0, 0, 1, 1], [], []>} : vector<2x16xf32>, vector<16x4xf32>, vector<2x4xf32> -> vector<2x4xf32>
    %c1_24 = arith.constant 1 : index
    %c0_25 = arith.constant 0 : index
    %c0_26 = arith.constant 0 : index
    %40 = vector.load %arg3[%c1_24, %c0_25, %c0_26] : memref<2x2x4xf32, #tpu.memory_space<vmem>>, vector<1x2x4xf32>
    %41 = vector.shape_cast %40 : vector<1x2x4xf32> to vector<2x4xf32>
    %42 = vector.shape_cast %39 : vector<2x4xf32> to vector<1x2x4xf32>
    tpu.vector_store %arg3[%c1_24, %c0_25, %c0_26], %42 {strides = array<i32>} : memref<2x2x4xf32, #tpu.memory_space<vmem>>, vector<1x2x4xf32>,
    return
  }
}

</mosaic_0001>

<llo_original>
// kernel: tpu_custom_call.1
$region0: #{tpu_custom_call.1}
  #allocation0 [shape = 'u32[]', space=smem, size = 0x4, offset = 0x4, fixed_abs, tag = 'smem constant byte address 0x4 - core index']
  #allocation1 [shape = 'u32[144,128]{1,0:T(1,128)}', space=vmem, size = 0x12000, scoped, tag = 'internal scratch']
  %s0 = inlined_call_operand.vmem [shape: f32[2,16], index: 0, kind: input, shape index: {}]
  %s1 = inlined_call_operand.vmem [shape: f32[2,16,16], index: 1, kind: input, shape index: {}]
  %s2 = inlined_call_operand.vmem [shape: f32[2,16,4], index: 2, kind: input, shape index: {}]
  %s3 = inlined_call_operand.hbm [shape: f32[2,2,4], index: 3, kind: output, shape index: {}]
  %s4 = sld [smem:[#allocation0]]
  $region22: #{tpu_custom_call.1} parent=0
    _
  %s6 = ssub.s32 1, %s4
  %s7 = scalar_select 0, %s6, %s4
  $region1: #{tpu_custom_call.1} parent=0
    #allocation2 [shape = 'u8[2048]{0}', space=vmem, size = 0x800, scoped, tag = 'output window, operand 0, single buffered']
    #allocation3 [shape = 's32[1]{0}', space=sflag, size = 0x4, scoped, tag = 'scoped memory for tpu_custom_call.1']
    %8 = vsyncpa [#allocation3], 0
    // Predicated region
    $region2: #{tpu_custom_call.1} parent=1 // pred_check
      _
    $region3: #{tpu_custom_call.1} parent=1 // pred_check_branch
      %10 = sbr.rel (0) target = $region5
    $region4: #{tpu_custom_call.1} parent=1 // pred_region
      _
    $region5: #{tpu_custom_call.1} parent=1 // pred_fallthru
      _
    // Predicated region
    $region6: #{tpu_custom_call.1} parent=1 // pred_check
      _
    $region7: #{tpu_custom_call.1} parent=1 // pred_check_branch
      %12 = sbr.rel (0) target = $region9
    $region8: #{tpu_custom_call.1} parent=1 // pred_region
      _
    $region9: #{tpu_custom_call.1} parent=1 // pred_fallthru
      _
    // Predicated region
    $region10: #{tpu_custom_call.1} parent=1 // pred_check
      _
    $region11: #{tpu_custom_call.1} parent=1 // pred_check_branch
      %14 = sbr.rel (0) target = $region13
    $region12: #{tpu_custom_call.1} parent=1 // pred_region
      _
    $region13: #{tpu_custom_call.1} parent=1 // pred_fallthru
      _
    %v15 = vld [vmem:[%s0] sm:$0x3]
    %v16 = vld [vmem:[%s1] sm:$0xff]
    %v17 = vld [vmem:[%s1 + $0x8] sm:$0xff]
    %v18 = vld [vmem:[%s2] sm:$0xff]
    %v19 = vld [vmem:[%s2 + $0x8] sm:$0xff]
    %vm20 = vcmask 130048
    %v22 = vsel %vm20, %v15, 0
    %v25 = vsel %vm20, %v16, 0
    %v28 = vsel %vm20, %v17, 0
    %30 = vmatprep.subr.mxu0 0.0
    %31 = vmatpush1.xpose.msra.mxu0 %v25
    %32 = vmatprep.subr.mxu0 0.0
    %33 = vmatpush1.xpose.msra.mxu0 %v28
    %34 = vmatprep.subr.mxu0 0.0
    %35 = vmatpush1.xpose.msra.mxu0 0.0
    %36 = vmatprep.subr.mxu0 0.0
    %37 = vmatpush1.xpose.msra.mxu0 0.0
    %38 = vmatprep.subr.mxu0 0.0
    %39 = vmatpush1.xpose.msra.mxu0 0.0
    %40 = vmatprep.subr.mxu0 0.0
    %41 = vmatpush1.xpose.msra.mxu0 0.0
    %42 = vmatprep.subr.mxu0 0.0
    %43 = vmatpush1.xpose.msra.mxu0 0.0
    %44 = vmatprep.subr.mxu0 0.0
    %45 = vmatpush1.xpose.msra.mxu0 0.0
    %46 = vmatprep.subr.mxu0 0.0
    %47 = vmatpush1.xpose.msra.mxu0 0.0
    %48 = vmatprep.subr.mxu0 0.0
    %49 = vmatpush1.xpose.msra.mxu0 0.0
    %50 = vmatprep.subr.mxu0 0.0
    %51 = vmatpush1.xpose.msra.mxu0 0.0
    %52 = vmatprep.subr.mxu0 0.0
    %53 = vmatpush1.xpose.msra.mxu0 0.0
    %54 = vmatprep.subr.mxu0 0.0
    %55 = vmatpush1.xpose.msra.mxu0 0.0
    %56 = vmatprep.subr.mxu0 0.0
    %57 = vmatpush1.xpose.msra.mxu0 0.0
    %58 = vmatprep.subr.mxu0 0.0
    %59 = vmatpush1.xpose.msra.mxu0 0.0
    %60 = vmatprep.subr.mxu0 0.0
    %61 = vmatpush1.xpose.msra.mxu0 0.0
    %62 = vmatprep.subr.mxu0 0.0
    %63 = vmatpush1.xpose.msra.mxu0 0.0
    %64 = vmatprep.subr.mxu0 0.0
    %65 = vmatpush1.xpose.msra.mxu0 0.0
    %66 = vmatprep.subr.mxu0 0.0
    %67 = vmatpush1.xpose.msra.mxu0 0.0
    %68 = vmatprep.subr.mxu0 0.0
    %69 = vmatpush1.xpose.msra.mxu0 0.0
    %70 = vmatprep.subr.mxu0 0.0
    %71 = vmatpush1.xpose.msra.mxu0 0.0
    %72 = vmatprep.subr.mxu0 0.0
    %73 = vmatpush1.xpose.msra.mxu0 0.0
    %74 = vmatprep.subr.mxu0 0.0
    %75 = vmatpush1.xpose.msra.mxu0 0.0
    %76 = vmatprep.subr.mxu0 0.0
    %77 = vmatpush1.xpose.msra.mxu0 0.0
    %78 = vmatprep.subr.mxu0 0.0
    %79 = vmatpush1.xpose.msra.mxu0 0.0
    %80 = vmatprep.subr.mxu0 0.0
    %81 = vmatpush1.xpose.msra.mxu0 0.0
    %82 = vmatprep.subr.mxu0 0.0
    %83 = vmatpush1.xpose.msra.mxu0 0.0
    %84 = vmatprep.subr.mxu0 0.0
    %85 = vmatpush1.xpose.msra.mxu0 0.0
    %86 = vmatprep.subr.mxu0 0.0
    %87 = vmatpush1.xpose.msra.mxu0 0.0
    %88 = vmatprep.subr.mxu0 0.0
    %89 = vmatpush1.xpose.msra.mxu0 0.0
    %90 = vmatprep.subr.mxu0 0.0
    %91 = vmatpush1.xpose.msra.mxu0 0.0
    %92 = vmatprep.subr.mxu0 0.0
    %93 = vmatpush1.xpose.msra.mxu0 0.0
    %94 = vmatprep.mubr.f32.mxu0 0.0
    %95 = vmatmul.mubr.f32.gmra.mrb[0].mxu0 %v22
    %v96 = vpop.f32.mrb[0].mxu0
    %v97 = vadd.f32 0.0, %v96
    %v98 = vpop.f32.mrb[0].mxu0
    %99 = vdwg.mxu0
    %v100 = vmul.f32 %v97, 4.0
    %vm101 = vcmask 123904
    %v102 = vsel %vm101, %v100, -inf
    %103 = vmax.xlane.f32.xlu0 %v102
    %v104 = vpop.xlane.xlu0 %103
    %v105 = vsub.f32 %v100, %v104
    %v106 = vmul.f32 %v105, 1.442695
    %v107 = vpow.pop %v106
    %v108 = vsel %vm101, %v107, 0.0
    %109 = vadd.xlane.f32.xlu0 %v108
    %v110 = vpop.xlane.xlu0 %109
    %v111 = vrcp.pop %v110
    %v112 = vmul.f32 %v107, %v111
    %v114 = vsel %vm20, %v112, 0
    %116 = vmatprep.subr.mxu0 0.0
    %117 = vmatpush1.msra.mxu0 %v18
    %118 = vmatprep.subr.mxu0 0.0
    %119 = vmatpush1.msra.mxu0 %v19
    %120 = vmatprep.subr.mxu0 0.0
    %121 = vmatpush1.msra.mxu0 0.0
    %122 = vmatprep.subr.mxu0 0.0
    %123 = vmatpush1.msra.mxu0 0.0
    %124 = vmatprep.subr.mxu0 0.0
    %125 = vmatpush1.msra.mxu0 0.0
    %126 = vmatprep.subr.mxu0 0.0
    %127 = vmatpush1.msra.mxu0 0.0
    %128 = vmatprep.subr.mxu0 0.0
    %129 = vmatpush1.msra.mxu0 0.0
    %130 = vmatprep.subr.mxu0 0.0
    %131 = vmatpush1.msra.mxu0 0.0
    %132 = vmatprep.subr.mxu0 0.0
    %133 = vmatpush1.msra.mxu0 0.0
    %134 = vmatprep.subr.mxu0 0.0
    %135 = vmatpush1.msra.mxu0 0.0
    %136 = vmatprep.subr.mxu0 0.0
    %137 = vmatpush1.msra.mxu0 0.0
    %138 = vmatprep.subr.mxu0 0.0
    %139 = vmatpush1.msra.mxu0 0.0
    %140 = vmatprep.subr.mxu0 0.0
    %141 = vmatpush1.msra.mxu0 0.0
    %142 = vmatprep.subr.mxu0 0.0
    %143 = vmatpush1.msra.mxu0 0.0
    %144 = vmatprep.subr.mxu0 0.0
    %145 = vmatpush1.msra.mxu0 0.0
    %146 = vmatprep.subr.mxu0 0.0
    %147 = vmatpush1.msra.mxu0 0.0
    %148 = vmatprep.subr.mxu0 0.0
    %149 = vmatpush1.msra.mxu0 0.0
    %150 = vmatprep.subr.mxu0 0.0
    %151 = vmatpush1.msra.mxu0 0.0
    %152 = vmatprep.subr.mxu0 0.0
    %153 = vmatpush1.msra.mxu0 0.0
    %154 = vmatprep.subr.mxu0 0.0
    %155 = vmatpush1.msra.mxu0 0.0
    %156 = vmatprep.subr.mxu0 0.0
    %157 = vmatpush1.msra.mxu0 0.0
    %158 = vmatprep.subr.mxu0 0.0
    %159 = vmatpush1.msra.mxu0 0.0
    %160 = vmatprep.subr.mxu0 0.0
    %161 = vmatpush1.msra.mxu0 0.0
    %162 = vmatprep.subr.mxu0 0.0
    %163 = vmatpush1.msra.mxu0 0.0
    %164 = vmatprep.subr.mxu0 0.0
    %165 = vmatpush1.msra.mxu0 0.0
    %166 = vmatprep.subr.mxu0 0.0
    %167 = vmatpush1.msra.mxu0 0.0
    %168 = vmatprep.subr.mxu0 0.0
    %169 = vmatpush1.msra.mxu0 0.0
    %170 = vmatprep.subr.mxu0 0.0
    %171 = vmatpush1.msra.mxu0 0.0
    %172 = vmatprep.subr.mxu0 0.0
    %173 = vmatpush1.msra.mxu0 0.0
    %174 = vmatprep.subr.mxu0 0.0
    %175 = vmatpush1.msra.mxu0 0.0
    %176 = vmatprep.subr.mxu0 0.0
    %177 = vmatpush1.msra.mxu0 0.0
    %178 = vmatprep.subr.mxu0 0.0
    %179 = vmatpush1.msra.mxu0 0.0
    %180 = vmatprep.mubr.f32.mxu0 0.0
    %181 = vmatmul.mubr.f32.gmra.mrb[0].mxu0 %v114
    %v182 = vpop.f32.mrb[0].mxu0
    %v183 = vadd.f32 0.0, %v182
    %v184 = vpop.f32.mrb[0].mxu0
    %185 = vdwg.mxu0
    %vm186 = vcmask 25600
    %187 = vst.msk [vmem:[#allocation2] sm:$0x3] %vm186, %v183
    %s188 = scalar_lea.vmem %s1, 16
    %v189 = vld [vmem:[%s188] sm:$0xff]
    %v190 = vld [vmem:[%s188 + $0x8] sm:$0xff]
    %s191 = scalar_lea.vmem %s2, 16
    %v192 = vld [vmem:[%s191] sm:$0xff]
    %v193 = vld [vmem:[%s191 + $0x8] sm:$0xff]
    %v195 = vsel %vm20, %v189, 0
    %v198 = vsel %vm20, %v190, 0
    %200 = vmatprep.subr.mxu0 0.0
    %201 = vmatpush1.xpose.msra.mxu0 %v195
    %202 = vmatprep.subr.mxu0 0.0
    %203 = vmatpush1.xpose.msra.mxu0 %v198
    %204 = vmatprep.subr.mxu0 0.0
    %205 = vmatpush1.xpose.msra.mxu0 0.0
    %206 = vmatprep.subr.mxu0 0.0
    %207 = vmatpush1.xpose.msra.mxu0 0.0
    %208 = vmatprep.subr.mxu0 0.0
    %209 = vmatpush1.xpose.msra.mxu0 0.0
    %210 = vmatprep.subr.mxu0 0.0
    %211 = vmatpush1.xpose.msra.mxu0 0.0
    %212 = vmatprep.subr.mxu0 0.0
    %213 = vmatpush1.xpose.msra.mxu0 0.0
    %214 = vmatprep.subr.mxu0 0.0
    %215 = vmatpush1.xpose.msra.mxu0 0.0
    %216 = vmatprep.subr.mxu0 0.0
    %217 = vmatpush1.xpose.msra.mxu0 0.0
    %218 = vmatprep.subr.mxu0 0.0
    %219 = vmatpush1.xpose.msra.mxu0 0.0
    %220 = vmatprep.subr.mxu0 0.0
    %221 = vmatpush1.xpose.msra.mxu0 0.0
    %222 = vmatprep.subr.mxu0 0.0
    %223 = vmatpush1.xpose.msra.mxu0 0.0
    %224 = vmatprep.subr.mxu0 0.0
    %225 = vmatpush1.xpose.msra.mxu0 0.0
    %226 = vmatprep.subr.mxu0 0.0
    %227 = vmatpush1.xpose.msra.mxu0 0.0
    %228 = vmatprep.subr.mxu0 0.0
    %229 = vmatpush1.xpose.msra.mxu0 0.0
    %230 = vmatprep.subr.mxu0 0.0
    %231 = vmatpush1.xpose.msra.mxu0 0.0
    %232 = vmatprep.subr.mxu0 0.0
    %233 = vmatpush1.xpose.msra.mxu0 0.0
    %234 = vmatprep.subr.mxu0 0.0
    %235 = vmatpush1.xpose.msra.mxu0 0.0
    %236 = vmatprep.subr.mxu0 0.0
    %237 = vmatpush1.xpose.msra.mxu0 0.0
    %238 = vmatprep.subr.mxu0 0.0
    %239 = vmatpush1.xpose.msra.mxu0 0.0
    %240 = vmatprep.subr.mxu0 0.0
    %241 = vmatpush1.xpose.msra.mxu0 0.0
    %242 = vmatprep.subr.mxu0 0.0
    %243 = vmatpush1.xpose.msra.mxu0 0.0
    %244 = vmatprep.subr.mxu0 0.0
    %245 = vmatpush1.xpose.msra.mxu0 0.0
    %246 = vmatprep.subr.mxu0 0.0
    %247 = vmatpush1.xpose.msra.mxu0 0.0
    %248 = vmatprep.subr.mxu0 0.0
    %249 = vmatpush1.xpose.msra.mxu0 0.0
    %250 = vmatprep.subr.mxu0 0.0
    %251 = vmatpush1.xpose.msra.mxu0 0.0
    %252 = vmatprep.subr.mxu0 0.0
    %253 = vmatpush1.xpose.msra.mxu0 0.0
    %254 = vmatprep.subr.mxu0 0.0
    %255 = vmatpush1.xpose.msra.mxu0 0.0
    %256 = vmatprep.subr.mxu0 0.0
    %257 = vmatpush1.xpose.msra.mxu0 0.0
    %258 = vmatprep.subr.mxu0 0.0
    %259 = vmatpush1.xpose.msra.mxu0 0.0
    %260 = vmatprep.subr.mxu0 0.0
    %261 = vmatpush1.xpose.msra.mxu0 0.0
    %262 = vmatprep.subr.mxu0 0.0
    %263 = vmatpush1.xpose.msra.mxu0 0.0
    %264 = vmatprep.mubr.f32.mxu0 0.0
    %265 = vmatmul.mubr.f32.gmra.mrb[0].mxu0 %v22
    %v266 = vpop.f32.mrb[0].mxu0
    %v267 = vadd.f32 0.0, %v266
    %v268 = vpop.f32.mrb[0].mxu0
    %269 = vdwg.mxu0
    %v270 = vmul.f32 %v267, 4.0
    %v271 = vsel %vm101, %v270, -inf
    %272 = vmax.xlane.f32.xlu0 %v271
    %v273 = vpop.xlane.xlu0 %272
    %v274 = vsub.f32 %v270, %v273
    %v275 = vmul.f32 %v274, 1.442695
    %v276 = vpow.pop %v275
    %v277 = vsel %vm101, %v276, 0.0
    %278 = vadd.xlane.f32.xlu0 %v277
    %v279 = vpop.xlane.xlu0 %278
    %v280 = vrcp.pop %v279
    %v281 = vmul.f32 %v276, %v280
    %v283 = vsel %vm20, %v281, 0
    %285 = vmatprep.subr.mxu0 0.0
    %286 = vmatpush1.msra.mxu0 %v192
    %287 = vmatprep.subr.mxu0 0.0
    %288 = vmatpush1.msra.mxu0 %v193
    %289 = vmatprep.subr.mxu0 0.0
    %290 = vmatpush1.msra.mxu0 0.0
    %291 = vmatprep.subr.mxu0 0.0
    %292 = vmatpush1.msra.mxu0 0.0
    %293 = vmatprep.subr.mxu0 0.0
    %294 = vmatpush1.msra.mxu0 0.0
    %295 = vmatprep.subr.mxu0 0.0
    %296 = vmatpush1.msra.mxu0 0.0
    %297 = vmatprep.subr.mxu0 0.0
    %298 = vmatpush1.msra.mxu0 0.0
    %299 = vmatprep.subr.mxu0 0.0
    %300 = vmatpush1.msra.mxu0 0.0
    %301 = vmatprep.subr.mxu0 0.0
    %302 = vmatpush1.msra.mxu0 0.0
    %303 = vmatprep.subr.mxu0 0.0
    %304 = vmatpush1.msra.mxu0 0.0
    %305 = vmatprep.subr.mxu0 0.0
    %306 = vmatpush1.msra.mxu0 0.0
    %307 = vmatprep.subr.mxu0 0.0
    %308 = vmatpush1.msra.mxu0 0.0
    %309 = vmatprep.subr.mxu0 0.0
    %310 = vmatpush1.msra.mxu0 0.0
    %311 = vmatprep.subr.mxu0 0.0
    %312 = vmatpush1.msra.mxu0 0.0
    %313 = vmatprep.subr.mxu0 0.0
    %314 = vmatpush1.msra.mxu0 0.0
    %315 = vmatprep.subr.mxu0 0.0
    %316 = vmatpush1.msra.mxu0 0.0
    %317 = vmatprep.subr.mxu0 0.0
    %318 = vmatpush1.msra.mxu0 0.0
    %319 = vmatprep.subr.mxu0 0.0
    %320 = vmatpush1.msra.mxu0 0.0
    %321 = vmatprep.subr.mxu0 0.0
    %322 = vmatpush1.msra.mxu0 0.0
    %323 = vmatprep.subr.mxu0 0.0
    %324 = vmatpush1.msra.mxu0 0.0
    %325 = vmatprep.subr.mxu0 0.0
    %326 = vmatpush1.msra.mxu0 0.0
    %327 = vmatprep.subr.mxu0 0.0
    %328 = vmatpush1.msra.mxu0 0.0
    %329 = vmatprep.subr.mxu0 0.0
    %330 = vmatpush1.msra.mxu0 0.0
    %331 = vmatprep.subr.mxu0 0.0
    %332 = vmatpush1.msra.mxu0 0.0
    %333 = vmatprep.subr.mxu0 0.0
    %334 = vmatpush1.msra.mxu0 0.0
    %335 = vmatprep.subr.mxu0 0.0
    %336 = vmatpush1.msra.mxu0 0.0
    %337 = vmatprep.subr.mxu0 0.0
    %338 = vmatpush1.msra.mxu0 0.0
    %339 = vmatprep.subr.mxu0 0.0
    %340 = vmatpush1.msra.mxu0 0.0
    %341 = vmatprep.subr.mxu0 0.0
    %342 = vmatpush1.msra.mxu0 0.0
    %343 = vmatprep.subr.mxu0 0.0
    %344 = vmatpush1.msra.mxu0 0.0
    %345 = vmatprep.subr.mxu0 0.0
    %346 = vmatpush1.msra.mxu0 0.0
    %347 = vmatprep.subr.mxu0 0.0
    %348 = vmatpush1.msra.mxu0 0.0
    %349 = vmatprep.mubr.f32.mxu0 0.0
    %350 = vmatmul.mubr.f32.gmra.mrb[0].mxu0 %v283
    %v351 = vpop.f32.mrb[0].mxu0
    %v352 = vadd.f32 0.0, %v351
    %v353 = vpop.f32.mrb[0].mxu0
    %354 = vdwg.mxu0
    %s355 = scalar_lea.vmem [#allocation2], 2
    %356 = vst.msk [vmem:[%s355] sm:$0x3] %vm186, %v352
    // Predicated region
    $region14: #{tpu_custom_call.1} parent=1 // pred_check
      _
    $region15: #{tpu_custom_call.1} parent=1 // pred_check_branch
      %358 = sbr.rel (0) target = $region17
    $region16: #{tpu_custom_call.1} parent=1 // pred_region
      %s360 = ssub.s32 64, 64
      %361 = vsyncadd [#allocation3], %s360
      %s362 = sshll.u32 [#allocation2], 4
      %s363 = int_to_ptr.vmem [resolvable:$true] %s362
      %368 = dma.vmem_to_hbm [thread:$0]  %s363, 64, %s3, [#allocation3], 32, 32, 2
    $region17: #{tpu_custom_call.1} parent=1 // pred_fallthru
      _
    // Predicated region
    $region18: #{tpu_custom_call.1} parent=1 // pred_check
      _
    $region19: #{tpu_custom_call.1} parent=1 // pred_check_branch
      %370 = sbr.rel (0) target = $region21
    $region20: #{tpu_custom_call.1} parent=1 // pred_region
      %371 = dma.done [#allocation3], 64
    $region21: #{tpu_custom_call.1} parent=1 // pred_fallthru
      _
    %372 = vsyncpa [#allocation3], 1

</llo_original>
